<compile_context>
chip_gen: v7x
topology: tpu7x:2x2x1
jax: 0.10.0
libtpu: 0.0.40
codegen_flags: <defaults>
</compile_context>

<pallas_src>
import functools

import jax
import jax.numpy as jnp
from jax.experimental import pallas as pl
from jax.experimental.pallas import tpu as pltpu

LANE = 128
SUBLANE = 8


def _round_up(n, m):
    return -(-n // m) * m


def _cdiv(a, b):
    return -(-a // b)


def mnist_bnn_kernel(x_ref, w1_ref, w2_ref, w3_ref, b1_ref, b2_ref, b3_ref, o_ref):
    # x_ref : (bb, D)   native lane width, no HBM lane padding
    # w1_ref: (D, P)    b1_ref: (1, P)
    # w2_ref: (P, P)    b2_ref: (1, P)
    # w3_ref: (P, O)    b3_ref: (1, O)
    # o_ref : (bb, O)   narrow logits
    x = x_ref[...]

    # layer 1: [x, 1] @ W1  ==  x @ W1[:-1] + W1[-1]   (K = D contraction)
    z = jnp.dot(x, w1_ref[...], preferred_element_type=jnp.float32) + b1_ref[...]
    z = jnp.maximum(z, 0.0)

    # layer 2 (accumulate in f32; cast only the MXU operand if weights are bf16)
    z = jnp.dot(z.astype(w2_ref.dtype), w2_ref[...],
                preferred_element_type=jnp.float32) + b2_ref[...]
    z = jnp.maximum(z, 0.0)

    # layer 3: narrow N = out_dim output
    logits = jnp.dot(z.astype(w3_ref.dtype), w3_ref[...],
                     preferred_element_type=jnp.float32) + b3_ref[...]
    o_ref[...] = logits.astype(o_ref.dtype)


def prepare_params(w1, w2, w3, *, compute_dtype=jnp.float32):
    """One-time preprocessing: split bias rows, zero-pad the hidden dim to 128.

    Call once at model init and reuse for every forward call (hoists the
    per-call pad/stack XLA ops out of the hot path).  On v5e, pass
    compute_dtype=jnp.bfloat16 for ~3x MXU throughput (accumulation stays f32).
    Zero padding is numerically exact: padded hidden lanes of z are exactly 0
    (zero weight columns + zero bias), and padded contraction rows are zero.
    """
    D = w1.shape[0] - 1
    H = w1.shape[1]
    O = w3.shape[1]
    assert w2.shape == (H + 1, H) and w3.shape == (H + 1, O)
    P = _round_up(H, LANE)

    def pad(a, shape):
        return jnp.pad(a, [(0, t - s) for s, t in zip(a.shape, shape)])

    w1p = pad(w1[:-1, :], (D, P)).astype(compute_dtype)   # (D, P)
    w2p = pad(w2[:-1, :], (P, P)).astype(compute_dtype)   # (P, P)
    w3p = pad(w3[:-1, :], (P, O)).astype(compute_dtype)   # (P, O)
    b1p = pad(w1[-1:, :], (1, P)).astype(jnp.float32)     # (1, P)
    b2p = pad(w2[-1:, :], (1, P)).astype(jnp.float32)     # (1, P)
    b3p = w3[-1:, :].astype(jnp.float32)                  # (1, O)
    return (w1p, w2p, w3p, b1p, b2p, b3p)


def _choose_batch_tiling(B, block_b):
    """Pad B only to the sublane multiple (8) and split into an even number of
    near-equal tiles so v7x's two TensorCores both get work on the 'parallel'
    batch axis.  Padding waste is bounded by ~8*n_tiles rows, not block_b-1."""
    B8 = _round_up(B, SUBLANE)
    if B8 <= block_b:
        n = 2 if B8 >= 1024 else 1
    else:
        n = _cdiv(B8, block_b)
        n += n % 2  # even tile count for v7x megacore
    bb = _round_up(_cdiv(B8, n), SUBLANE)
    return bb, bb * n, n


@functools.partial(jax.jit, static_argnames=("block_b",))
def mnist_bnn_forward(x, params, *, block_b=1024):
    w1p, w2p, w3p, b1p, b2p, b3p = params
    B, D = x.shape
    P = w2p.shape[0]
    O = w3p.shape[1]
    assert w1p.shape == (D, P)

    bb, B_pad, n = _choose_batch_tiling(B, block_b)
    x = x.astype(w1p.dtype)
    if B_pad != B:
        # Sublane-only row pad (at most ~8*n ghost rows); fuses under jit.
        x = jnp.pad(x, ((0, B_pad - B), (0, 0)))

    itemsize = jnp.dtype(w1p.dtype).itemsize
    cost = pl.CostEstimate(
        flops=2 * B_pad * (D * P + P * P + P * O),
        transcendentals=0,
        bytes_accessed=(B_pad * D + D * P + P * P + P * O) * itemsize
        + (B_pad * O + 2 * P + O) * 4,
    )

    out = pl.pallas_call(
        mnist_bnn_kernel,
        out_shape=jax.ShapeDtypeStruct((B_pad, O), jnp.float32),
        grid_spec=pltpu.PrefetchScalarGridSpec(
            num_scalar_prefetch=0,
            grid=(n,),
            in_specs=[
                pl.BlockSpec((bb, D), lambda i: (i, 0)),   # batch tile, native width
                pl.BlockSpec((D, P), lambda i: (0, 0)),    # resident weights (DMA'd once)
                pl.BlockSpec((P, P), lambda i: (0, 0)),
                pl.BlockSpec((P, O), lambda i: (0, 0)),
                pl.BlockSpec((1, P), lambda i: (0, 0)),    # resident biases
                pl.BlockSpec((1, P), lambda i: (0, 0)),
                pl.BlockSpec((1, O), lambda i: (0, 0)),
            ],
            out_specs=pl.BlockSpec((bb, O), lambda i: (i, 0)),  # narrow logits
        ),
        compiler_params=pltpu.CompilerParams(
            dimension_semantics=("parallel",),
        ),
        cost_estimate=cost,
    )(x, w1p, w2p, w3p, b1p, b2p, b3p)

    return out[:B] if B_pad != B else out


def reference_forward(x, w1, w2, w3):
    ones = jnp.ones((x.shape[0], 1), dtype=jnp.float32)
    z = jnp.concatenate([x, ones], axis=-1) @ w1
    z = jnp.concatenate([jnp.maximum(z, 0.0), ones], axis=-1) @ w2
    return jnp.concatenate([jnp.maximum(z, 0.0), ones], axis=-1) @ w3


if __name__ == "__main__":
    # Module defaults: inp_dim=14, hidden_size=10, out_dim=2.
    inp_dim, hidden, out_dim = 14, 10, 2
    batch = 20  # small; not a multiple of 8, so the sublane pad + row-trim path runs

    key = jax.random.PRNGKey(0)
    kx, k1, k2, k3 = jax.random.split(key, 4)

    # Deterministic "torch.randn"-style init (synthetic weights, no checkpoint).
    x = jax.random.normal(kx, (batch, inp_dim), dtype=jnp.float32)
    W1 = jax.random.normal(k1, (inp_dim + 1, hidden), dtype=jnp.float32)
    W2 = jax.random.normal(k2, (hidden + 1, hidden), dtype=jnp.float32)
    W3 = jax.random.normal(k3, (hidden + 1, out_dim), dtype=jnp.float32)

    # One-time weight prep (use compute_dtype=jnp.bfloat16 on v5e).
    params = prepare_params(W1, W2, W3)

    logits = jax.block_until_ready(mnist_bnn_forward(x, params))

    ref = reference_forward(x, W1, W2, W3)
    assert logits.shape == (batch, out_dim)
    assert jnp.allclose(logits, ref, atol=1e-4, rtol=1e-4), "mismatch vs JAX reference"

    print("KERNEL_OK")
</pallas_src>

<mosaic_0001>
module attributes {stable_mosaic.version = 11 : i64} {
  func.func @mnist_bnn_kernel(%arg0: i32, %arg1: memref<24x14xf32, #tpu.memory_space<vmem>>, %arg2: memref<14x128xf32, #tpu.memory_space<vmem>>, %arg3: memref<128x128xf32, #tpu.memory_space<vmem>>, %arg4: memref<128x2xf32, #tpu.memory_space<vmem>>, %arg5: memref<1x128xf32, #tpu.memory_space<vmem>>, %arg6: memref<1x128xf32, #tpu.memory_space<vmem>>, %arg7: memref<1x2xf32, #tpu.memory_space<vmem>>, %arg8: memref<24x2xf32, #tpu.memory_space<vmem>>) attributes {dimension_semantics = [#tpu.dimension_semantics<parallel>], iteration_bounds = array<i64: 1>, scalar_prefetch = 0 : i64, scratch_operands = 0 : i64, tpu.core_type = #tpu.core_type<tc>, window_params = [{transform_indices = @transform_0, window_bounds = array<i64: 24, 14>}, {pipeline_mode = #tpu.pipeline_mode<synchronous>, transform_indices = @transform_1, window_bounds = array<i64: 14, 128>}, {pipeline_mode = #tpu.pipeline_mode<synchronous>, transform_indices = @transform_2, window_bounds = array<i64: 128, 128>}, {pipeline_mode = #tpu.pipeline_mode<synchronous>, transform_indices = @transform_3, window_bounds = array<i64: 128, 2>}, {pipeline_mode = #tpu.pipeline_mode<synchronous>, transform_indices = @transform_4, window_bounds = array<i64: 1, 128>}, {pipeline_mode = #tpu.pipeline_mode<synchronous>, transform_indices = @transform_5, window_bounds = array<i64: 1, 128>}, {pipeline_mode = #tpu.pipeline_mode<synchronous>, transform_indices = @transform_6, window_bounds = array<i64: 1, 2>}, {transform_indices = @transform_7, window_bounds = array<i64: 24, 2>}]} {
    %c0 = arith.constant 0 : index
    %c0_0 = arith.constant 0 : index
    %0 = vector.load %arg1[%c0, %c0_0] : memref<24x14xf32, #tpu.memory_space<vmem>>, vector<24x14xf32>
    %c0_1 = arith.constant 0 : index
    %c0_2 = arith.constant 0 : index
    %1 = vector.load %arg2[%c0_1, %c0_2] : memref<14x128xf32, #tpu.memory_space<vmem>>, vector<14x128xf32>
    %cst = arith.constant dense<0.000000e+00> : vector<24x128xf32>
    %2 = tpu.matmul %0, %1, %cst {dimension_numbers = #tpu.dot_dimension_numbers<[1], [0], [0], [1], [0, 0, 1, 1], [], []>} : vector<24x14xf32>, vector<14x128xf32>, vector<24x128xf32> -> vector<24x128xf32>
    %c0_3 = arith.constant 0 : index
    %c0_4 = arith.constant 0 : index
    %3 = vector.load %arg5[%c0_3, %c0_4] : memref<1x128xf32, #tpu.memory_space<vmem>>, vector<1x128xf32>
    %4 = vector.broadcast %3 : vector<1x128xf32> to vector<24x128xf32>
    %5 = arith.addf %2, %4 : vector<24x128xf32>
    %cst_5 = arith.constant 0.000000e+00 : f32
    %6 = vector.broadcast %cst_5 : f32 to vector<24x128xf32>
    %7 = arith.maximumf %5, %6 : vector<24x128xf32>
    %c0_6 = arith.constant 0 : index
    %c0_7 = arith.constant 0 : index
    %8 = vector.load %arg3[%c0_6, %c0_7] : memref<128x128xf32, #tpu.memory_space<vmem>>, vector<128x128xf32>
    %cst_8 = arith.constant dense<0.000000e+00> : vector<24x128xf32>
    %9 = tpu.matmul %7, %8, %cst_8 {dimension_numbers = #tpu.dot_dimension_numbers<[1], [0], [0], [1], [0, 0, 1, 1], [], []>} : vector<24x128xf32>, vector<128x128xf32>, vector<24x128xf32> -> vector<24x128xf32>
    %c0_9 = arith.constant 0 : index
    %c0_10 = arith.constant 0 : index
    %10 = vector.load %arg6[%c0_9, %c0_10] : memref<1x128xf32, #tpu.memory_space<vmem>>, vector<1x128xf32>
    %11 = vector.broadcast %10 : vector<1x128xf32> to vector<24x128xf32>
    %12 = arith.addf %9, %11 : vector<24x128xf32>
    %cst_11 = arith.constant 0.000000e+00 : f32
    %13 = vector.broadcast %cst_11 : f32 to vector<24x128xf32>
    %14 = arith.maximumf %12, %13 : vector<24x128xf32>
    %c0_12 = arith.constant 0 : index
    %c0_13 = arith.constant 0 : index
    %15 = vector.load %arg4[%c0_12, %c0_13] : memref<128x2xf32, #tpu.memory_space<vmem>>, vector<128x2xf32>
    %cst_14 = arith.constant dense<0.000000e+00> : vector<24x2xf32>
    %16 = tpu.matmul %14, %15, %cst_14 {dimension_numbers = #tpu.dot_dimension_numbers<[1], [0], [0], [1], [0, 0, 1, 1], [], []>} : vector<24x128xf32>, vector<128x2xf32>, vector<24x2xf32> -> vector<24x2xf32>
    %c0_15 = arith.constant 0 : index
    %c0_16 = arith.constant 0 : index
    %17 = vector.load %arg7[%c0_15, %c0_16] : memref<1x2xf32, #tpu.memory_space<vmem>>, vector<1x2xf32>
    %18 = vector.broadcast %17 : vector<1x2xf32> to vector<24x2xf32>
    %19 = arith.addf %16, %18 : vector<24x2xf32>
    %c0_17 = arith.constant 0 : index
    %c0_18 = arith.constant 0 : index
    %20 = vector.load %arg8[%c0_17, %c0_18] : memref<24x2xf32, #tpu.memory_space<vmem>>, vector<24x2xf32>
    tpu.vector_store %arg8[%c0_17, %c0_18], %19 {strides = array<i32>} : memref<24x2xf32, #tpu.memory_space<vmem>>, vector<24x2xf32>,
    return
  }
  func.func @transform_0(%arg0: i32) -> (i32, i32) {
    %c0_i32 = arith.constant 0 : i32
    %c0_i32_0 = arith.constant 0 : i32
    return %arg0, %c0_i32 : i32, i32
  }
  func.func @transform_1(%arg0: i32) -> (i32, i32) {
    %c0_i32 = arith.constant 0 : i32
    %c0_i32_0 = arith.constant 0 : i32
    %c0_i32_1 = arith.constant 0 : i32
    return %c0_i32, %c0_i32_0 : i32, i32
  }
  func.func @transform_2(%arg0: i32) -> (i32, i32) {
    %c0_i32 = arith.constant 0 : i32
    %c0_i32_0 = arith.constant 0 : i32
    %c0_i32_1 = arith.constant 0 : i32
    return %c0_i32, %c0_i32_0 : i32, i32
  }
  func.func @transform_3(%arg0: i32) -> (i32, i32) {
    %c0_i32 = arith.constant 0 : i32
    %c0_i32_0 = arith.constant 0 : i32
    %c0_i32_1 = arith.constant 0 : i32
    return %c0_i32, %c0_i32_0 : i32, i32
  }
  func.func @transform_4(%arg0: i32) -> (i32, i32) {
    %c0_i32 = arith.constant 0 : i32
    %c0_i32_0 = arith.constant 0 : i32
    %c0_i32_1 = arith.constant 0 : i32
    return %c0_i32, %c0_i32_0 : i32, i32
  }
  func.func @transform_5(%arg0: i32) -> (i32, i32) {
    %c0_i32 = arith.constant 0 : i32
    %c0_i32_0 = arith.constant 0 : i32
    %c0_i32_1 = arith.constant 0 : i32
    return %c0_i32, %c0_i32_0 : i32, i32
  }
  func.func @transform_6(%arg0: i32) -> (i32, i32) {
    %c0_i32 = arith.constant 0 : i32
    %c0_i32_0 = arith.constant 0 : i32
    %c0_i32_1 = arith.constant 0 : i32
    return %c0_i32, %c0_i32_0 : i32, i32
  }
  func.func @transform_7(%arg0: i32) -> (i32, i32) {
    %c0_i32 = arith.constant 0 : i32
    %c0_i32_0 = arith.constant 0 : i32
    return %arg0, %c0_i32 : i32, i32
  }
}

</mosaic_0001>

<llo_original>
// kernel: mnist_bnn_forward.1
$region0: #{mnist_bnn_forward.1}
  #allocation0 [shape = 'u32[]', space=smem, size = 0x4, offset = 0x4, fixed_abs, tag = 'smem constant byte address 0x4 - core index']
  #allocation1 [shape = 'u32[144,128]{1,0:T(1,128)}', space=vmem, size = 0x12000, scoped, tag = 'internal scratch']
  %s0 = inlined_call_operand.vmem [shape: f32[24,14], index: 0, kind: input, shape index: {}]
  %s1 = inlined_call_operand.vmem [shape: f32[14,128], index: 1, kind: input, shape index: {}]
  %s2 = inlined_call_operand.vmem [shape: f32[128,128], index: 2, kind: input, shape index: {}]
  %s3 = inlined_call_operand.vmem [shape: f32[128,2], index: 3, kind: input, shape index: {}]
  %s4 = inlined_call_operand.vmem [shape: f32[1,128], index: 4, kind: input, shape index: {}]
  %s5 = inlined_call_operand.vmem [shape: f32[1,128], index: 5, kind: input, shape index: {}]
  %s6 = inlined_call_operand.vmem [shape: f32[1,2], index: 6, kind: input, shape index: {}]
  %s7 = inlined_call_operand.vmem [shape: f32[24,2], index: 7, kind: output, shape index: {}]
  %s8 = sld [smem:[#allocation0]]
  $region38: #{mnist_bnn_forward.1} parent=0
    _
  %s10 = ssub.s32 1, %s8
  %s11 = scalar_select 0, %s10, %s8
  // Predicated region
  $region2: #{mnist_bnn_forward.1} parent=0 // pred_check
    _
  $region3: #{mnist_bnn_forward.1} parent=0 // pred_check_branch
    %13 = sbr.rel (0) target = $region5
  $region4: #{mnist_bnn_forward.1} parent=0 // pred_region
    _
  $region5: #{mnist_bnn_forward.1} parent=0 // pred_fallthru
    _
  // Predicated region
  $region6: #{mnist_bnn_forward.1} parent=0 // pred_check
    _
  $region7: #{mnist_bnn_forward.1} parent=0 // pred_check_branch
    %15 = sbr.rel (0) target = $region9
  $region8: #{mnist_bnn_forward.1} parent=0 // pred_region
    _
  $region9: #{mnist_bnn_forward.1} parent=0 // pred_fallthru
    _
  // Predicated region
  $region10: #{mnist_bnn_forward.1} parent=0 // pred_check
    _
  $region11: #{mnist_bnn_forward.1} parent=0 // pred_check_branch
    %17 = sbr.rel (0) target = $region13
  $region12: #{mnist_bnn_forward.1} parent=0 // pred_region
    _
  $region13: #{mnist_bnn_forward.1} parent=0 // pred_fallthru
    _
  // Predicated region
  $region14: #{mnist_bnn_forward.1} parent=0 // pred_check
    _
  $region15: #{mnist_bnn_forward.1} parent=0 // pred_check_branch
    %19 = sbr.rel (0) target = $region17
  $region16: #{mnist_bnn_forward.1} parent=0 // pred_region
    _
  $region17: #{mnist_bnn_forward.1} parent=0 // pred_fallthru
    _
  // Predicated region
  $region18: #{mnist_bnn_forward.1} parent=0 // pred_check
    _
  $region19: #{mnist_bnn_forward.1} parent=0 // pred_check_branch
    %21 = sbr.rel (0) target = $region21
  $region20: #{mnist_bnn_forward.1} parent=0 // pred_region
    _
  $region21: #{mnist_bnn_forward.1} parent=0 // pred_fallthru
    _
  // Predicated region
  $region22: #{mnist_bnn_forward.1} parent=0 // pred_check
    _
  $region23: #{mnist_bnn_forward.1} parent=0 // pred_check_branch
    %23 = sbr.rel (0) target = $region25
  $region24: #{mnist_bnn_forward.1} parent=0 // pred_region
    _
  $region25: #{mnist_bnn_forward.1} parent=0 // pred_fallthru
    _
  // Predicated region
  $region26: #{mnist_bnn_forward.1} parent=0 // pred_check
    _
  $region27: #{mnist_bnn_forward.1} parent=0 // pred_check_branch
    %25 = sbr.rel (0) target = $region29
  $region28: #{mnist_bnn_forward.1} parent=0 // pred_region
    _
  $region29: #{mnist_bnn_forward.1} parent=0 // pred_fallthru
    _
  %v26 = vld [vmem:[%s0] sm:$0xff]
  %v27 = vld [vmem:[%s0 + $0x8] sm:$0xff]
  %v28 = vld [vmem:[%s0 + $0x10] sm:$0xff]
  %v29 = vld [vmem:[%s1] sm:$0xff]
  %v30 = vld [vmem:[%s1 + $0x8] sm:$0x3f]
  %v31 = vld [vmem:[%s4] sm:$0x1]
  %v33 = vlaneseq
  %v34 = vshrl.u32 %v33, 7
  %v35 = vsub.s32 0, %v34
  %v36 = vrot.slane %v31, %v35
  %vm38 = vcmask 113664
  %v40 = vsel %vm38, %v26, 0
  %v43 = vsel %vm38, %v27, 0
  %v46 = vsel %vm38, %v28, 0
  %vm48 = vcmask 1045504
  %v50 = vsel %vm48, %v30, 0
  %52 = vmatprep.subr.mxu0 0.0
  %53 = vmatpush1.msra.mxu0 %v29
  %54 = vmatprep.subr.mxu0 0.0
  %55 = vmatpush1.msra.mxu0 %v50
  %56 = vmatprep.subr.mxu0 0.0
  %57 = vmatpush1.msra.mxu0 0.0
  %58 = vmatprep.subr.mxu0 0.0
  %59 = vmatpush1.msra.mxu0 0.0
  %60 = vmatprep.subr.mxu0 0.0
  %61 = vmatpush1.msra.mxu0 0.0
  %62 = vmatprep.subr.mxu0 0.0
  %63 = vmatpush1.msra.mxu0 0.0
  %64 = vmatprep.subr.mxu0 0.0
  %65 = vmatpush1.msra.mxu0 0.0
  %66 = vmatprep.subr.mxu0 0.0
  %67 = vmatpush1.msra.mxu0 0.0
  %68 = vmatprep.subr.mxu0 0.0
  %69 = vmatpush1.msra.mxu0 0.0
  %70 = vmatprep.subr.mxu0 0.0
  %71 = vmatpush1.msra.mxu0 0.0
  %72 = vmatprep.subr.mxu0 0.0
  %73 = vmatpush1.msra.mxu0 0.0
  %74 = vmatprep.subr.mxu0 0.0
  %75 = vmatpush1.msra.mxu0 0.0
  %76 = vmatprep.subr.mxu0 0.0
  %77 = vmatpush1.msra.mxu0 0.0
  %78 = vmatprep.subr.mxu0 0.0
  %79 = vmatpush1.msra.mxu0 0.0
  %80 = vmatprep.subr.mxu0 0.0
  %81 = vmatpush1.msra.mxu0 0.0
  %82 = vmatprep.subr.mxu0 0.0
  %83 = vmatpush1.msra.mxu0 0.0
  %84 = vmatprep.subr.mxu0 0.0
  %85 = vmatpush1.msra.mxu0 0.0
  %86 = vmatprep.subr.mxu0 0.0
  %87 = vmatpush1.msra.mxu0 0.0
  %88 = vmatprep.subr.mxu0 0.0
  %89 = vmatpush1.msra.mxu0 0.0
  %90 = vmatprep.subr.mxu0 0.0
  %91 = vmatpush1.msra.mxu0 0.0
  %92 = vmatprep.subr.mxu0 0.0
  %93 = vmatpush1.msra.mxu0 0.0
  %94 = vmatprep.subr.mxu0 0.0
  %95 = vmatpush1.msra.mxu0 0.0
  %96 = vmatprep.subr.mxu0 0.0
  %97 = vmatpush1.msra.mxu0 0.0
  %98 = vmatprep.subr.mxu0 0.0
  %99 = vmatpush1.msra.mxu0 0.0
  %100 = vmatprep.subr.mxu0 0.0
  %101 = vmatpush1.msra.mxu0 0.0
  %102 = vmatprep.subr.mxu0 0.0
  %103 = vmatpush1.msra.mxu0 0.0
  %104 = vmatprep.subr.mxu0 0.0
  %105 = vmatpush1.msra.mxu0 0.0
  %106 = vmatprep.subr.mxu0 0.0
  %107 = vmatpush1.msra.mxu0 0.0
  %108 = vmatprep.subr.mxu0 0.0
  %109 = vmatpush1.msra.mxu0 0.0
  %110 = vmatprep.subr.mxu0 0.0
  %111 = vmatpush1.msra.mxu0 0.0
  %112 = vmatprep.subr.mxu0 0.0
  %113 = vmatpush1.msra.mxu0 0.0
  %114 = vmatprep.subr.mxu0 0.0
  %115 = vmatpush1.msra.mxu0 0.0
  %116 = vmatprep.mubr.f32.mxu0 0.0
  %117 = vmatmul.mubr.f32.gmra.mrb[0].mxu0 %v40
  %v118 = vpop.f32.mrb[0].mxu0
  %v119 = vadd.f32 %v36, %v118
  %v120 = vpop.f32.mrb[0].mxu0
  %121 = vmatprep.mubr.f32.mxu0 0.0
  %122 = vmatmul.mubr.f32.gmra.mrb[0].mxu0 %v43
  %v123 = vpop.f32.mrb[0].mxu0
  %v124 = vadd.f32 %v36, %v123
  %v125 = vpop.f32.mrb[0].mxu0
  %126 = vmatprep.mubr.f32.mxu0 0.0
  %127 = vmatmul.mubr.f32.gmra.mrb[0].mxu0 %v46
  %v128 = vpop.f32.mrb[0].mxu0
  %v129 = vadd.f32 %v36, %v128
  %v130 = vpop.f32.mrb[0].mxu0
  %131 = vdwg.mxu0
  %v132 = vmax.f32 %v119, 0.0
  %v133 = vmax.f32 %v124, 0.0
  %v134 = vmax.f32 %v129, 0.0
  %v135 = vld [vmem:[%s2] sm:$0xff]
  %v136 = vld [vmem:[%s2 + $0x8] sm:$0xff]
  %v137 = vld [vmem:[%s2 + $0x10] sm:$0xff]
  %v138 = vld [vmem:[%s2 + $0x18] sm:$0xff]
  %v139 = vld [vmem:[%s2 + $0x20] sm:$0xff]
  %v140 = vld [vmem:[%s2 + $0x28] sm:$0xff]
  %v141 = vld [vmem:[%s2 + $0x30] sm:$0xff]
  %v142 = vld [vmem:[%s2 + $0x38] sm:$0xff]
  %v143 = vld [vmem:[%s2 + $0x40] sm:$0xff]
  %v144 = vld [vmem:[%s2 + $0x48] sm:$0xff]
  %v145 = vld [vmem:[%s2 + $0x50] sm:$0xff]
  %v146 = vld [vmem:[%s2 + $0x58] sm:$0xff]
  %v147 = vld [vmem:[%s2 + $0x60] sm:$0xff]
  %v148 = vld [vmem:[%s2 + $0x68] sm:$0xff]
  %v149 = vld [vmem:[%s2 + $0x70] sm:$0xff]
  %v150 = vld [vmem:[%s2 + $0x78] sm:$0xff]
  %v151 = vld [vmem:[%s5] sm:$0x1]
  %v153 = vlaneseq
  %v154 = vshrl.u32 %v153, 7
  %v155 = vsub.s32 0, %v154
  %v156 = vrot.slane %v151, %v155
  %158 = vmatprep.subr.mxu0 0.0
  %159 = vmatpush1.msra.mxu0 %v135
  %160 = vmatprep.subr.mxu0 0.0
  %161 = vmatpush1.msra.mxu0 %v136
  %162 = vmatprep.subr.mxu0 0.0
  %163 = vmatpush1.msra.mxu0 %v137
  %164 = vmatprep.subr.mxu0 0.0
  %165 = vmatpush1.msra.mxu0 %v138
  %166 = vmatprep.subr.mxu0 0.0
  %167 = vmatpush1.msra.mxu0 %v139
  %168 = vmatprep.subr.mxu0 0.0
  %169 = vmatpush1.msra.mxu0 %v140
  %170 = vmatprep.subr.mxu0 0.0
  %171 = vmatpush1.msra.mxu0 %v141
  %172 = vmatprep.subr.mxu0 0.0
  %173 = vmatpush1.msra.mxu0 %v142
  %174 = vmatprep.subr.mxu0 0.0
  %175 = vmatpush1.msra.mxu0 %v143
  %176 = vmatprep.subr.mxu0 0.0
  %177 = vmatpush1.msra.mxu0 %v144
  %178 = vmatprep.subr.mxu0 0.0
  %179 = vmatpush1.msra.mxu0 %v145
  %180 = vmatprep.subr.mxu0 0.0
  %181 = vmatpush1.msra.mxu0 %v146
  %182 = vmatprep.subr.mxu0 0.0
  %183 = vmatpush1.msra.mxu0 %v147
  %184 = vmatprep.subr.mxu0 0.0
  %185 = vmatpush1.msra.mxu0 %v148
  %186 = vmatprep.subr.mxu0 0.0
  %187 = vmatpush1.msra.mxu0 %v149
  %188 = vmatprep.subr.mxu0 0.0
  %189 = vmatpush1.msra.mxu0 %v150
  %190 = vmatprep.subr.mxu0 0.0
  %191 = vmatpush1.msra.mxu0 0.0
  %192 = vmatprep.subr.mxu0 0.0
  %193 = vmatpush1.msra.mxu0 0.0
  %194 = vmatprep.subr.mxu0 0.0
  %195 = vmatpush1.msra.mxu0 0.0
  %196 = vmatprep.subr.mxu0 0.0
  %197 = vmatpush1.msra.mxu0 0.0
  %198 = vmatprep.subr.mxu0 0.0
  %199 = vmatpush1.msra.mxu0 0.0
  %200 = vmatprep.subr.mxu0 0.0
  %201 = vmatpush1.msra.mxu0 0.0
  %202 = vmatprep.subr.mxu0 0.0
  %203 = vmatpush1.msra.mxu0 0.0
  %204 = vmatprep.subr.mxu0 0.0
  %205 = vmatpush1.msra.mxu0 0.0
  %206 = vmatprep.subr.mxu0 0.0
  %207 = vmatpush1.msra.mxu0 0.0
  %208 = vmatprep.subr.mxu0 0.0
  %209 = vmatpush1.msra.mxu0 0.0
  %210 = vmatprep.subr.mxu0 0.0
  %211 = vmatpush1.msra.mxu0 0.0
  %212 = vmatprep.subr.mxu0 0.0
  %213 = vmatpush1.msra.mxu0 0.0
  %214 = vmatprep.subr.mxu0 0.0
  %215 = vmatpush1.msra.mxu0 0.0
  %216 = vmatprep.subr.mxu0 0.0
  %217 = vmatpush1.msra.mxu0 0.0
  %218 = vmatprep.subr.mxu0 0.0
  %219 = vmatpush1.msra.mxu0 0.0
  %220 = vmatprep.subr.mxu0 0.0
  %221 = vmatpush1.msra.mxu0 0.0
  %222 = vmatprep.mubr.f32.mxu0 0.0
  %223 = vmatmul.mubr.f32.gmra.mrb[0].mxu0 %v132
  %v224 = vpop.f32.mrb[0].mxu0
  %v225 = vadd.f32 %v156, %v224
  %v226 = vpop.f32.mrb[0].mxu0
  %227 = vmatprep.mubr.f32.mxu0 0.0
  %228 = vmatmul.mubr.f32.gmra.mrb[0].mxu0 %v133
  %v229 = vpop.f32.mrb[0].mxu0
  %v230 = vadd.f32 %v156, %v229
  %v231 = vpop.f32.mrb[0].mxu0
  %232 = vmatprep.mubr.f32.mxu0 0.0
  %233 = vmatmul.mubr.f32.gmra.mrb[0].mxu0 %v134
  %v234 = vpop.f32.mrb[0].mxu0
  %v235 = vadd.f32 %v156, %v234
  %v236 = vpop.f32.mrb[0].mxu0
  %237 = vdwg.mxu0
  %v238 = vmax.f32 %v225, 0.0
  %v239 = vmax.f32 %v230, 0.0
  %v240 = vmax.f32 %v235, 0.0
  %v241 = vld [vmem:[%s3] sm:$0xff]
  %v242 = vld [vmem:[%s3 + $0x8] sm:$0xff]
  %v243 = vld [vmem:[%s3 + $0x10] sm:$0xff]
  %v244 = vld [vmem:[%s3 + $0x18] sm:$0xff]
  %v245 = vld [vmem:[%s3 + $0x20] sm:$0xff]
  %v246 = vld [vmem:[%s3 + $0x28] sm:$0xff]
  %v247 = vld [vmem:[%s3 + $0x30] sm:$0xff]
  %v248 = vld [vmem:[%s3 + $0x38] sm:$0xff]
  %v249 = vld [vmem:[%s3 + $0x40] sm:$0xff]
  %v250 = vld [vmem:[%s3 + $0x48] sm:$0xff]
  %v251 = vld [vmem:[%s3 + $0x50] sm:$0xff]
  %v252 = vld [vmem:[%s3 + $0x58] sm:$0xff]
  %v253 = vld [vmem:[%s3 + $0x60] sm:$0xff]
  %v254 = vld [vmem:[%s3 + $0x68] sm:$0xff]
  %v255 = vld [vmem:[%s3 + $0x70] sm:$0xff]
  %v256 = vld [vmem:[%s3 + $0x78] sm:$0xff]
  %v257 = vld [vmem:[%s6] sm:$0x1]
  %v259 = vlaneseq
  %v260 = vshrl.u32 %v259, 7
  %v261 = vsub.s32 0, %v260
  %v262 = vrot.slane %v257, %v261
  %264 = vmatprep.subr.mxu0 0.0
  %265 = vmatpush1.msra.mxu0 %v241
  %266 = vmatprep.subr.mxu0 0.0
  %267 = vmatpush1.msra.mxu0 %v242
  %268 = vmatprep.subr.mxu0 0.0
  %269 = vmatpush1.msra.mxu0 %v243
  %270 = vmatprep.subr.mxu0 0.0
  %271 = vmatpush1.msra.mxu0 %v244
  %272 = vmatprep.subr.mxu0 0.0
  %273 = vmatpush1.msra.mxu0 %v245
  %274 = vmatprep.subr.mxu0 0.0
  %275 = vmatpush1.msra.mxu0 %v246
  %276 = vmatprep.subr.mxu0 0.0
  %277 = vmatpush1.msra.mxu0 %v247
  %278 = vmatprep.subr.mxu0 0.0
  %279 = vmatpush1.msra.mxu0 %v248
  %280 = vmatprep.subr.mxu0 0.0
  %281 = vmatpush1.msra.mxu0 %v249
  %282 = vmatprep.subr.mxu0 0.0
  %283 = vmatpush1.msra.mxu0 %v250
  %284 = vmatprep.subr.mxu0 0.0
  %285 = vmatpush1.msra.mxu0 %v251
  %286 = vmatprep.subr.mxu0 0.0
  %287 = vmatpush1.msra.mxu0 %v252
  %288 = vmatprep.subr.mxu0 0.0
  %289 = vmatpush1.msra.mxu0 %v253
  %290 = vmatprep.subr.mxu0 0.0
  %291 = vmatpush1.msra.mxu0 %v254
  %292 = vmatprep.subr.mxu0 0.0
  %293 = vmatpush1.msra.mxu0 %v255
  %294 = vmatprep.subr.mxu0 0.0
  %295 = vmatpush1.msra.mxu0 %v256
  %296 = vmatprep.subr.mxu0 0.0
  %297 = vmatpush1.msra.mxu0 0.0
  %298 = vmatprep.subr.mxu0 0.0
  %299 = vmatpush1.msra.mxu0 0.0
  %300 = vmatprep.subr.mxu0 0.0
  %301 = vmatpush1.msra.mxu0 0.0
  %302 = vmatprep.subr.mxu0 0.0
  %303 = vmatpush1.msra.mxu0 0.0
  %304 = vmatprep.subr.mxu0 0.0
  %305 = vmatpush1.msra.mxu0 0.0
  %306 = vmatprep.subr.mxu0 0.0
  %307 = vmatpush1.msra.mxu0 0.0
  %308 = vmatprep.subr.mxu0 0.0
  %309 = vmatpush1.msra.mxu0 0.0
  %310 = vmatprep.subr.mxu0 0.0
  %311 = vmatpush1.msra.mxu0 0.0
  %312 = vmatprep.subr.mxu0 0.0
  %313 = vmatpush1.msra.mxu0 0.0
  %314 = vmatprep.subr.mxu0 0.0
  %315 = vmatpush1.msra.mxu0 0.0
  %316 = vmatprep.subr.mxu0 0.0
  %317 = vmatpush1.msra.mxu0 0.0
  %318 = vmatprep.subr.mxu0 0.0
  %319 = vmatpush1.msra.mxu0 0.0
  %320 = vmatprep.subr.mxu0 0.0
  %321 = vmatpush1.msra.mxu0 0.0
  %322 = vmatprep.subr.mxu0 0.0
  %323 = vmatpush1.msra.mxu0 0.0
  %324 = vmatprep.subr.mxu0 0.0
  %325 = vmatpush1.msra.mxu0 0.0
  %326 = vmatprep.subr.mxu0 0.0
  %327 = vmatpush1.msra.mxu0 0.0
  %328 = vmatprep.mubr.f32.mxu0 0.0
  %329 = vmatmul.mubr.f32.gmra.mrb[0].mxu0 %v238
  %v330 = vpop.f32.mrb[0].mxu0
  %v331 = vadd.f32 %v262, %v330
  %v332 = vpop.f32.mrb[0].mxu0
  %333 = vmatprep.mubr.f32.mxu0 0.0
  %334 = vmatmul.mubr.f32.gmra.mrb[0].mxu0 %v239
  %v335 = vpop.f32.mrb[0].mxu0
  %v336 = vadd.f32 %v262, %v335
  %v337 = vpop.f32.mrb[0].mxu0
  %338 = vmatprep.mubr.f32.mxu0 0.0
  %339 = vmatmul.mubr.f32.gmra.mrb[0].mxu0 %v240
  %v340 = vpop.f32.mrb[0].mxu0
  %v341 = vadd.f32 %v262, %v340
  %v342 = vpop.f32.mrb[0].mxu0
  %343 = vdwg.mxu0
  %vm344 = vcmask 15360
  %345 = vst.msk [vmem:[%s7] sm:$0xff] %vm344, %v331
  %346 = vst.msk [vmem:[%s7 + $0x8] sm:$0xff] %vm344, %v336
  %347 = vst.msk [vmem:[%s7 + $0x10] sm:$0xff] %vm344, %v341
  // Predicated region
  $region30: #{mnist_bnn_forward.1} parent=0 // pred_check
    _
  $region31: #{mnist_bnn_forward.1} parent=0 // pred_check_branch
    %349 = sbr.rel (0) target = $region33
  $region32: #{mnist_bnn_forward.1} parent=0 // pred_region
    _
  $region33: #{mnist_bnn_forward.1} parent=0 // pred_fallthru
    _
  // Predicated region
  $region34: #{mnist_bnn_forward.1} parent=0 // pred_check
    _
  $region35: #{mnist_bnn_forward.1} parent=0 // pred_check_branch
    %351 = sbr.rel (0) target = $region37
  $region36: #{mnist_bnn_forward.1} parent=0 // pred_region
    _
  $region37: #{mnist_bnn_forward.1} parent=0 // pred_fallthru
    _

</llo_original>
